<compile_context>
chip_gen: v6e
topology: v6e:2x2x1
jax: 0.10.0
libtpu: 0.0.40
codegen_flags: <defaults>
</compile_context>

<pallas_src>
import functools

import jax
import jax.numpy as jnp
from jax.experimental import pallas as pl
from jax.experimental.pallas import tpu as pltpu


def _round_up(x, m):
    return (x + m - 1) // m * m


def _conv_stats_kernel(p_ref, w_ref, b_ref, conv_ref, stats_ref, *, m_valid, tile_m):
    # p_ref:     (TILE_M, K_pad)   bf16  im2col patches
    # w_ref:     (K_pad, TILE_N)   bf16  flattened conv weight
    # b_ref:     (1, TILE_N)       f32   conv bias
    # conv_ref:  (TILE_M, TILE_N)  f32   conv output tile
    # stats_ref: (1, 8, TILE_N)    f32   row0 = sum, row1 = sum of squares
    acc = jnp.dot(p_ref[...], w_ref[...], preferred_element_type=jnp.float32)
    acc = acc + b_ref[...]
    conv_ref[...] = acc

    # Mask padded rows (M was rounded up to a multiple of TILE_M) so they do
    # not contribute to the BatchNorm statistics.
    m = pl.program_id(0)
    row = m * tile_m + jax.lax.broadcasted_iota(jnp.int32, acc.shape, 0)
    accv = jnp.where(row < m_valid, acc, 0.0)

    tile_n = acc.shape[1]
    s = jnp.sum(accv, axis=0, keepdims=True)           # (1, TILE_N)
    sq = jnp.sum(accv * accv, axis=0, keepdims=True)   # (1, TILE_N)
    pad = jnp.zeros((6, tile_n), jnp.float32)
    stats_ref[...] = jnp.concatenate([s, sq, pad], axis=0)[None]


def _bn_relu_kernel(conv_ref, scale_ref, shift_ref, o_ref):
    # conv_ref: (TILE_M, TILE_N) f32; scale/shift: (1, TILE_N) f32
    y = conv_ref[...] * scale_ref[...] + shift_ref[...]
    o_ref[...] = jnp.maximum(y, 0.0)


def conv2d_bn_relu(x_nchw, w_oihw, bias, gamma, beta, *, tile_m=256, tile_n=128):
    """PyTorch-convention wrapper: x is NCHW, weight is OIHW. Returns NCHW f32."""
    x = jnp.transpose(x_nchw, (0, 2, 3, 1))   # NHWC
    w = jnp.transpose(w_oihw, (2, 3, 1, 0))   # HWIO
    N, H, W, Cin = x.shape
    KH, KW, _, Cout = w.shape
    OH, OW = H - KH + 1, W - KW + 1
    M = N * OH * OW
    K = KH * KW * Cin

    K_pad = _round_up(K, 128)
    Cout_pad = _round_up(Cout, tile_n)
    M_pad = _round_up(M, tile_m)
    grid_m = M_pad // tile_m
    grid_n = Cout_pad // tile_n

    # --- im2col patch build (pure layout transform; all FLOPs stay in Pallas) ---
    xb = x.astype(jnp.bfloat16)
    cols = [xb[:, ki:ki + OH, kj:kj + OW, :] for ki in range(KH) for kj in range(KW)]
    patches = jnp.concatenate(cols, axis=-1).reshape(M, K)      # row = ((ki*KW+kj)*Cin+ci)
    patches = jnp.pad(patches, ((0, M_pad - M), (0, K_pad - K)))

    w_flat = jnp.pad(w.reshape(K, Cout).astype(jnp.bfloat16),
                     ((0, K_pad - K), (0, Cout_pad - Cout)))
    b_pad = jnp.pad(bias.astype(jnp.float32), (0, Cout_pad - Cout)).reshape(1, Cout_pad)
    g_pad = jnp.pad(gamma.astype(jnp.float32), (0, Cout_pad - Cout))
    be_pad = jnp.pad(beta.astype(jnp.float32), (0, Cout_pad - Cout))

    # --- pass 1: conv GEMM + bias, plus per-tile BN partial sums ---
    kernel1 = functools.partial(_conv_stats_kernel, m_valid=M, tile_m=tile_m)
    conv_out, stats = pl.pallas_call(
        kernel1,
        out_shape=(
            jax.ShapeDtypeStruct((M_pad, Cout_pad), jnp.float32),
            jax.ShapeDtypeStruct((grid_m, 8, Cout_pad), jnp.float32),
        ),
        grid=(grid_m, grid_n),
        in_specs=[
            pl.BlockSpec((tile_m, K_pad), lambda m, n: (m, 0)),
            pl.BlockSpec((K_pad, tile_n), lambda m, n: (0, n)),
            pl.BlockSpec((1, tile_n), lambda m, n: (0, n)),
        ],
        out_specs=(
            pl.BlockSpec((tile_m, tile_n), lambda m, n: (m, n)),
            pl.BlockSpec((1, 8, tile_n), lambda m, n: (m, 0, n)),
        ),
        compiler_params=pltpu.CompilerParams(
            dimension_semantics=("parallel", "parallel")),
    )(patches, w_flat, b_pad)

    # --- cross-tile BN reduction (tiny per-channel vectors; f32) ---
    sum_c = jnp.sum(stats[:, 0, :], axis=0)
    sumsq_c = jnp.sum(stats[:, 1, :], axis=0)
    mean = sum_c / M
    # E[x^2]-E[x]^2 in f32 (biased variance, matches BN training mode).
    var = jnp.maximum(sumsq_c / M - mean * mean, 0.0)
    rstd = jax.lax.rsqrt(var + 1e-5)
    scale = (g_pad * rstd).reshape(1, Cout_pad)
    shift = (be_pad - mean * g_pad * rstd).reshape(1, Cout_pad)

    # --- pass 2: normalize + affine + ReLU over the stored conv output ---
    y = pl.pallas_call(
        _bn_relu_kernel,
        out_shape=jax.ShapeDtypeStruct((M_pad, Cout_pad), jnp.float32),
        grid=(grid_m, grid_n),
        in_specs=[
            pl.BlockSpec((tile_m, tile_n), lambda m, n: (m, n)),
            pl.BlockSpec((1, tile_n), lambda m, n: (0, n)),
            pl.BlockSpec((1, tile_n), lambda m, n: (0, n)),
        ],
        out_specs=pl.BlockSpec((tile_m, tile_n), lambda m, n: (m, n)),
        compiler_params=pltpu.CompilerParams(
            dimension_semantics=("parallel", "parallel")),
    )(conv_out, scale, shift)

    y = y[:M, :Cout].reshape(N, OH, OW, Cout)
    return jnp.transpose(y, (0, 3, 1, 2))  # back to NCHW


def init_params(key, in_ch, out_ch, kernel):
    """Deterministic init mimicking nn.Conv2d defaults (uniform +-1/sqrt(fan_in))."""
    kw, kb = jax.random.split(key)
    fan_in = in_ch * kernel * kernel
    bound = 1.0 / jnp.sqrt(jnp.float32(fan_in))
    weight = jax.random.uniform(
        kw, (out_ch, in_ch, kernel, kernel), jnp.float32, -bound, bound)
    bias = jax.random.uniform(kb, (out_ch,), jnp.float32, -bound, bound)
    gamma = jnp.ones((out_ch,), jnp.float32)   # BatchNorm2d weight
    beta = jnp.zeros((out_ch,), jnp.float32)   # BatchNorm2d bias
    return weight, bias, gamma, beta


def _reference(x, weight, bias, gamma, beta):
    conv = jax.lax.conv_general_dilated(
        x, weight, window_strides=(1, 1), padding="VALID",
        dimension_numbers=("NCHW", "OIHW", "NCHW"))
    conv = conv + bias[None, :, None, None]
    mean = jnp.mean(conv, axis=(0, 2, 3), keepdims=True)
    var = jnp.mean((conv - mean) ** 2, axis=(0, 2, 3), keepdims=True)
    y = (conv - mean) * jax.lax.rsqrt(var + 1e-5)
    y = y * gamma[None, :, None, None] + beta[None, :, None, None]
    return jnp.maximum(y, 0.0)


if __name__ == "__main__":
    in_ch, out_ch, kernel = 4, 8, 3
    key = jax.random.PRNGKey(0)
    kx, kp = jax.random.split(key)

    x = jax.random.normal(kx, (2, in_ch, 16, 16), jnp.float32)  # NCHW
    weight, bias, gamma, beta = init_params(kp, in_ch, out_ch, kernel)

    out = conv2d_bn_relu(x, weight, bias, gamma, beta)
    out = jax.block_until_ready(out)

    assert out.shape == (2, out_ch, 14, 14), out.shape
    ref = _reference(x, weight, bias, gamma, beta)
    # bf16 MXU inputs -> allow a generous tolerance vs the f32 reference.
    assert bool(jnp.all(jnp.abs(out - ref) < 0.08)), float(jnp.max(jnp.abs(out - ref)))
    print("KERNEL_OK")
</pallas_src>

<mosaic_0001>
module attributes {stable_mosaic.version = 11 : i64} {
  func.func @_conv_stats_kernel(%arg0: i32, %arg1: i32, %arg2: memref<256x128xbf16, #tpu.memory_space<vmem>>, %arg3: memref<128x128xbf16, #tpu.memory_space<vmem>>, %arg4: memref<1x128xf32, #tpu.memory_space<vmem>>, %arg5: memref<256x128xf32, #tpu.memory_space<vmem>>, %arg6: memref<1x8x128xf32, #tpu.memory_space<vmem>>) attributes {dimension_semantics = [#tpu.dimension_semantics<parallel>, #tpu.dimension_semantics<parallel>], iteration_bounds = array<i64: 2, 1>, scalar_prefetch = 0 : i64, scratch_operands = 0 : i64, tpu.core_type = #tpu.core_type<tc>, window_params = [{transform_indices = @transform_0, window_bounds = array<i64: 256, 128>}, {transform_indices = @transform_1, window_bounds = array<i64: 128, 128>}, {transform_indices = @transform_2, window_bounds = array<i64: 1, 128>}, {transform_indices = @transform_3, window_bounds = array<i64: 256, 128>}, {transform_indices = @transform_4, window_bounds = array<i64: 1, 8, 128>}]} {
    %c0 = arith.constant 0 : index
    %c0_0 = arith.constant 0 : index
    %0 = vector.load %arg2[%c0, %c0_0] : memref<256x128xbf16, #tpu.memory_space<vmem>>, vector<256x128xbf16>
    %c0_1 = arith.constant 0 : index
    %c0_2 = arith.constant 0 : index
    %1 = vector.load %arg3[%c0_1, %c0_2] : memref<128x128xbf16, #tpu.memory_space<vmem>>, vector<128x128xbf16>
    %cst = arith.constant dense<0.000000e+00> : vector<256x128xf32>
    %2 = tpu.matmul %0, %1, %cst {dimension_numbers = #tpu.dot_dimension_numbers<[1], [0], [0], [1], [0, 0, 1, 1], [], []>} : vector<256x128xbf16>, vector<128x128xbf16>, vector<256x128xf32> -> vector<256x128xf32>
    %c0_3 = arith.constant 0 : index
    %c0_4 = arith.constant 0 : index
    %3 = vector.load %arg4[%c0_3, %c0_4] : memref<1x128xf32, #tpu.memory_space<vmem>>, vector<1x128xf32>
    %4 = vector.broadcast %3 : vector<1x128xf32> to vector<256x128xf32>
    %5 = arith.addf %2, %4 : vector<256x128xf32>
    %c0_5 = arith.constant 0 : index
    %c0_6 = arith.constant 0 : index
    %6 = vector.load %arg5[%c0_5, %c0_6] : memref<256x128xf32, #tpu.memory_space<vmem>>, vector<256x128xf32>
    tpu.vector_store %arg5[%c0_5, %c0_6], %5 {strides = array<i32>} : memref<256x128xf32, #tpu.memory_space<vmem>>, vector<256x128xf32>,
    %c256_i32 = arith.constant 256 : i32
    %7 = arith.muli %arg0, %c256_i32 : i32
    %8 = tpu.iota {dimensions = array<i32: 0>} : vector<256x128xi32>
    %9 = vector.broadcast %7 : i32 to vector<256x128xi32>
    %10 = arith.addi %9, %8 : vector<256x128xi32>
    %c392_i32 = arith.constant 392 : i32
    %11 = vector.broadcast %c392_i32 : i32 to vector<256x128xi32>
    %12 = arith.cmpi slt, %10, %11 : vector<256x128xi32>
    %cst_7 = arith.constant 0.000000e+00 : f32
    %13 = vector.broadcast %cst_7 : f32 to vector<256x128xf32>
    %14 = arith.select %12, %5, %13 : vector<256x128xi1>, vector<256x128xf32>
    %cst_8 = arith.constant dense<0.000000e+00> : vector<128xf32>
    %15 = vector.multi_reduction <add>, %14, %cst_8 [0] : vector<256x128xf32> to vector<128xf32>
    %16 = vector.shape_cast %15 : vector<128xf32> to vector<1x128xf32>
    %17 = arith.mulf %14, %14 : vector<256x128xf32>
    %cst_9 = arith.constant dense<0.000000e+00> : vector<128xf32>
    %18 = vector.multi_reduction <add>, %17, %cst_9 [0] : vector<256x128xf32> to vector<128xf32>
    %19 = vector.shape_cast %18 : vector<128xf32> to vector<1x128xf32>
    %cst_10 = arith.constant 0.000000e+00 : f32
    %20 = vector.broadcast %cst_10 : f32 to vector<6x128xf32>
    %21 = tpu.concatenate %16, %19, %20 in 0 : vector<1x128xf32>, vector<1x128xf32>, vector<6x128xf32> -> vector<8x128xf32>
    %22 = vector.shape_cast %21 : vector<8x128xf32> to vector<1x8x128xf32>
    %c0_11 = arith.constant 0 : index
    %c0_12 = arith.constant 0 : index
    %c0_13 = arith.constant 0 : index
    %23 = vector.load %arg6[%c0_11, %c0_12, %c0_13] : memref<1x8x128xf32, #tpu.memory_space<vmem>>, vector<1x8x128xf32>
    tpu.vector_store %arg6[%c0_11, %c0_12, %c0_13], %22 {strides = array<i32>} : memref<1x8x128xf32, #tpu.memory_space<vmem>>, vector<1x8x128xf32>,
    return
  }
  func.func @transform_0(%arg0: i32, %arg1: i32) -> (i32, i32) {
    %c0_i32 = arith.constant 0 : i32
    %c0_i32_0 = arith.constant 0 : i32
    return %arg0, %c0_i32 : i32, i32
  }
  func.func @transform_1(%arg0: i32, %arg1: i32) -> (i32, i32) {
    %c0_i32 = arith.constant 0 : i32
    %c0_i32_0 = arith.constant 0 : i32
    return %c0_i32, %arg1 : i32, i32
  }
  func.func @transform_2(%arg0: i32, %arg1: i32) -> (i32, i32) {
    %c0_i32 = arith.constant 0 : i32
    %c0_i32_0 = arith.constant 0 : i32
    return %c0_i32, %arg1 : i32, i32
  }
  func.func @transform_3(%arg0: i32, %arg1: i32) -> (i32, i32) {
    %c0_i32 = arith.constant 0 : i32
    return %arg0, %arg1 : i32, i32
  }
  func.func @transform_4(%arg0: i32, %arg1: i32) -> (i32, i32, i32) {
    %c0_i32 = arith.constant 0 : i32
    %c0_i32_0 = arith.constant 0 : i32
    return %arg0, %c0_i32, %arg1 : i32, i32, i32
  }
}

</mosaic_0001>

<llo_original>
// kernel: tpu_custom_call.1
$region0: #{tpu_custom_call.1}
  #allocation0 [shape = 'u32[]', space=smem, size = 0x4, offset = 0x4, fixed_abs, tag = 'smem constant byte address 0x4 - core index']
  #allocation1 [shape = 'u32[144,128]{1,0:T(1,128)}', space=vmem, size = 0x12000, scoped, tag = 'internal scratch']
  %s0 = inlined_call_operand.hbm [shape: bf16[512,128], index: 0, kind: input, shape index: {}]
  %s1 = inlined_call_operand.hbm [shape: bf16[128,128], index: 1, kind: input, shape index: {}]
  %s2 = inlined_call_operand.vmem [shape: f32[1,128], index: 2, kind: input, shape index: {}]
  %s3 = inlined_call_operand.hbm [shape: f32[512,128], index: 3, kind: output, shape index: {0}]
  %s4 = inlined_call_operand.hbm [shape: f32[2,8,128], index: 4, kind: output, shape index: {1}]
  %5 = xla_tuple %s3, %s4
  %s6 = sld [smem:[#allocation0]]
  $region61: #{tpu_custom_call.1} parent=0
    _
  %s8 = ssub.s32 1, %s6
  %s9 = scalar_select 0, %s8, %s6
  $region1: #{tpu_custom_call.1} parent=0
    #allocation2 [shape = 'u8[131072]{0}', space=vmem, size = 0x20000, scoped, tag = 'input window, operand 0']
    #allocation3 [shape = 's32[2]{0}', space=sflag, size = 0x8, scoped, tag = 'scoped memory for tpu_custom_call.1']
    #allocation4 [shape = 's32[2]{0}', space=sflag, size = 0x8, scoped, tag = 'scoped memory for tpu_custom_call.1']
    #allocation5 [shape = 'u8[32768]{0}', space=vmem, size = 0x8000, scoped, tag = 'input window, operand 1, single buffered']
    #allocation6 [shape = 's32[1]{0}', space=sflag, size = 0x4, scoped, tag = 'scoped memory for tpu_custom_call.1']
    #allocation7 [shape = 'u8[262144]{0}', space=vmem, size = 0x40000, scoped, tag = 'output window, operand 0']
    #allocation8 [shape = 'u8[8192]{0}', space=vmem, size = 0x2000, scoped, tag = 'output window, operand 1']
    #allocation9 [shape = 's32[2]{0}', space=sflag, size = 0x8, scoped, tag = 'scoped memory for tpu_custom_call.1']
    %10 = vsyncpa [#allocation3], 0
    %s11 = scalar_lea.sflag [#allocation3], 1
    %12 = vsyncpa %s11, 0
    %13 = vsyncpa [#allocation6], 0
    %14 = vsyncpa [#allocation4], 0
    %s15 = scalar_lea.sflag [#allocation4], 1
    %16 = vsyncpa %s15, 0
    %17 = vsyncpa [#allocation9], 0
    %s18 = scalar_lea.sflag [#allocation9], 1
    %19 = vsyncpa %s18, 0
    loop: start=0, step=1, limit=4
    $region2: #{tpu_custom_call.1} parent=1 // loop_pre_header
      _
    $region3: #{tpu_custom_call.1} parent=1 // loop_header
      %s21 = sphi 0, %s25
      %p22 = scmp.ge.s32.totalorder %s21, 4
      %s28 = sphi 0, %s40
      %s29 = sphi 0, %s36
      %s30 = sphi 0, %s28
      %s31 = sphi 0, %s29
      %s32 = sphi 0, %s30
      %s33 = sphi 0, %s31
      %s43 = sphi 0, %s45
      %s46 = sphi 0, %s43
      %s47 = sphi 0, %s46
      %s63 = sphi 0, %s47
      %s69 = sphi 0, %s71
      %s72 = sphi 0, %s69
      %s73 = sphi 0, %s72
      %s89 = sphi 0, %s73
      %s95 = sphi 0, %s97
      %s98 = sphi 0, %s95
      %s99 = sphi 0, %s98
      %s115 = sphi 0, %s99
      %s123 = sphi 0, %s125
      %s126 = sphi 0, %s123
      %s127 = sphi 0, %s126
      %s143 = sphi 0, %s127
      %s151 = sphi 0, %s153
      %s154 = sphi 0, %s151
      %s155 = sphi 0, %s154
      %s171 = sphi 0, %s155
    $region4: #{tpu_custom_call.1} parent=1 // loop_header_branch
      %24 = sbr.rel (%p22) target = $region8
    $region5: #{tpu_custom_call.1} parent=1 // loop_body
      %s26 = ssub.s32 %s21, 1
      %s27 = ssub.s32 %s21, 2
      %s34 = sadd.s32 1, %s29
      %p35 = scmp.ge.s32.totalorder %s34, 1
      %s36 = scalar_select %p35, 0, %s34
      %s37 = sadd.s32 1, %s28
      %s38 = scalar_select %p35, %s37, %s28
      %p39 = scmp.ge.s32.totalorder %s38, 2
      %s40 = scalar_select %p39, 0, %s38
      %s41 = ssub.s32 %s28, %s40
      %p42 = scmp.eq.s32.totalorder %s41, 0
      %s44 = sadd.s32 %s43, 1
      %s45 = scalar_select %p42, %s43, %s44
      %p48 = pneg %p42
      %p49 = scmp.eq.s32.totalorder %s21, 1
      %p50 = por %p48, %p49
      %p51 = scmp.ne.s32.totalorder %s43, %s46
      %p52 = scmp.eq.s32.totalorder %s21, 0
      %p53 = por %p51, %p52
      %p54 = scmp.ne.s32.totalorder %s43, %s46
      %p55 = scmp.eq.s32.totalorder %s26, 1
      %p56 = por %p54, %p55
      %p57 = scmp.ne.s32.totalorder %s46, %s47
      %p58 = scmp.eq.s32.totalorder %s26, 0
      %p59 = por %p57, %p58
      %p60 = scmp.ne.s32.totalorder %s46, %s47
      %p61 = scmp.eq.s32.totalorder %s27, 1
      %p62 = por %p60, %p61
      %p64 = scmp.ne.s32.totalorder %s47, %s63
      %p65 = scmp.eq.s32.totalorder %s27, 0
      %p66 = por %p64, %p65
      %s67 = ssub.s32 %s29, %s36
      %p68 = scmp.eq.s32.totalorder %s67, 0
      %s70 = sadd.s32 %s69, 1
      %s71 = scalar_select %p68, %s69, %s70
      %p74 = pneg %p68
      %p75 = scmp.eq.s32.totalorder %s21, 1
      %p76 = por %p74, %p75
      %p77 = scmp.ne.s32.totalorder %s69, %s72
      %p78 = scmp.eq.s32.totalorder %s21, 0
      %p79 = por %p77, %p78
      %p80 = scmp.ne.s32.totalorder %s69, %s72
      %p81 = scmp.eq.s32.totalorder %s26, 1
      %p82 = por %p80, %p81
      %p83 = scmp.ne.s32.totalorder %s72, %s73
      %p84 = scmp.eq.s32.totalorder %s26, 0
      %p85 = por %p83, %p84
      %p86 = scmp.ne.s32.totalorder %s72, %s73
      %p87 = scmp.eq.s32.totalorder %s27, 1
      %p88 = por %p86, %p87
      %p90 = scmp.ne.s32.totalorder %s73, %s89
      %p91 = scmp.eq.s32.totalorder %s27, 0
      %p92 = por %p90, %p91
      %s93 = ssub.s32 %s29, %s36
      %p94 = scmp.eq.s32.totalorder %s93, 0
      %s96 = sadd.s32 %s95, 1
      %s97 = scalar_select %p94, %s95, %s96
      %p100 = pneg %p94
      %p101 = scmp.eq.s32.totalorder %s21, 1
      %p102 = por %p100, %p101
      %p103 = scmp.ne.s32.totalorder %s95, %s98
      %p104 = scmp.eq.s32.totalorder %s21, 0
      %p105 = por %p103, %p104
      %p106 = scmp.ne.s32.totalorder %s95, %s98
      %p107 = scmp.eq.s32.totalorder %s26, 1
      %p108 = por %p106, %p107
      %p109 = scmp.ne.s32.totalorder %s98, %s99
      %p110 = scmp.eq.s32.totalorder %s26, 0
      %p111 = por %p109, %p110
      %p112 = scmp.ne.s32.totalorder %s98, %s99
      %p113 = scmp.eq.s32.totalorder %s27, 1
      %p114 = por %p112, %p113
      %p116 = scmp.ne.s32.totalorder %s99, %s115
      %p117 = scmp.eq.s32.totalorder %s27, 0
      %p118 = por %p116, %p117
      %s119 = ssub.s32 %s28, %s40
      %s120 = ssub.s32 %s29, %s36
      %s121 = sor.u32 %s119, %s120
      %p122 = scmp.eq.s32.totalorder %s121, 0
      %s124 = sadd.s32 %s123, 1
      %s125 = scalar_select %p122, %s123, %s124
      %p128 = pneg %p122
      %p129 = scmp.eq.s32.totalorder %s21, 1
      %p130 = por %p128, %p129
      %p131 = scmp.ne.s32.totalorder %s123, %s126
      %p132 = scmp.eq.s32.totalorder %s21, 0
      %p133 = por %p131, %p132
      %p134 = scmp.ne.s32.totalorder %s123, %s126
      %p135 = scmp.eq.s32.totalorder %s26, 1
      %p136 = por %p134, %p135
      %p137 = scmp.ne.s32.totalorder %s126, %s127
      %p138 = scmp.eq.s32.totalorder %s26, 0
      %p139 = por %p137, %p138
      %p140 = scmp.ne.s32.totalorder %s126, %s127
      %p141 = scmp.eq.s32.totalorder %s27, 1
      %p142 = por %p140, %p141
      %p144 = scmp.ne.s32.totalorder %s127, %s143
      %p145 = scmp.eq.s32.totalorder %s27, 0
      %p146 = por %p144, %p145
      %s147 = ssub.s32 %s28, %s40
      %s148 = ssub.s32 %s29, %s36
      %s149 = sor.u32 %s147, %s148
      %p150 = scmp.eq.s32.totalorder %s149, 0
      %s152 = sadd.s32 %s151, 1
      %s153 = scalar_select %p150, %s151, %s152
      %p156 = pneg %p150
      %p157 = scmp.eq.s32.totalorder %s21, 1
      %p158 = por %p156, %p157
      %p159 = scmp.ne.s32.totalorder %s151, %s154
      %p160 = scmp.eq.s32.totalorder %s21, 0
      %p161 = por %p159, %p160
      %p162 = scmp.ne.s32.totalorder %s151, %s154
      %p163 = scmp.eq.s32.totalorder %s26, 1
      %p164 = por %p162, %p163
      %p165 = scmp.ne.s32.totalorder %s154, %s155
      %p166 = scmp.eq.s32.totalorder %s26, 0
      %p167 = por %p165, %p166
      %p168 = scmp.ne.s32.totalorder %s154, %s155
      %p169 = scmp.eq.s32.totalorder %s27, 1
      %p170 = por %p168, %p169
      %p172 = scmp.ne.s32.totalorder %s155, %s171
      %p173 = scmp.eq.s32.totalorder %s27, 0
      %p174 = por %p172, %p173
      %p175 = scmp.le.s32.totalorder 1, %s21
      %p176 = scmp.lt.s32.totalorder %s21, 3
      %p177 = pnand %p175, %p176
      %p178 = pneg %p177
      // Predicated region
      $region9: #{tpu_custom_call.1} parent=5 // pred_check
        _
      $region10: #{tpu_custom_call.1} parent=5 // pred_check_branch
        %180 = sbr.rel (%p177) target = $region12
      $region11: #{tpu_custom_call.1} parent=5 // pred_region
        %s181 = ssub.s32 %s21, 1
        // Predicated region
        $region13: #{tpu_custom_call.1} parent=11 // pred_check
          %p182 = pneg %p85
        $region14: #{tpu_custom_call.1} parent=11 // pred_check_branch
          %184 = sbr.rel (%p182) target = $region16
        $region15: #{tpu_custom_call.1} parent=11 // pred_region
          %s186 = ssub.s32 1024, 1024
          %187 = vsyncadd [#allocation6], %s186
          %s188 = smul.addr %s31, 64
          %s189 = scalar_lea.hbm %s1, %s188
          %s190 = sshll.u32 [#allocation5], 4
          %s191 = int_to_ptr.vmem [resolvable:$true] %s190
          %196 = dma.hbm_to_vmem [thread:$0]  %s189, 1024, %s191, [#allocation6], 64, 64, 4
        $region16: #{tpu_custom_call.1} parent=11 // pred_fallthru
          _
        // Predicated region
        $region17: #{tpu_custom_call.1} parent=11 // pred_check
          %p197 = pneg %p111
        $region18: #{tpu_custom_call.1} parent=11 // pred_check_branch
          %199 = sbr.rel (%p197) target = $region20
        $region19: #{tpu_custom_call.1} parent=11 // pred_region
          %p200 = scmp.lt.s32.totalorder %s31, 0
          %s201 = scalar_select %p200, %s31, 0
          %s202 = scalar_lea.vmem %s2, %s201
        $region20: #{tpu_custom_call.1} parent=11 // pred_fallthru
          _
      $region12: #{tpu_custom_call.1} parent=5 // pred_fallthru
        _
      %p203 = scmp.lt.s32.totalorder %s21, 2
      // Predicated region
      $region21: #{tpu_custom_call.1} parent=5 // pred_check
        %p204 = pneg %p203
      $region22: #{tpu_custom_call.1} parent=5 // pred_check_branch
        %206 = sbr.rel (%p204) target = $region24
      $region23: #{tpu_custom_call.1} parent=5 // pred_region
        // Predicated region
        $region25: #{tpu_custom_call.1} parent=23 // pred_check
          %p207 = pneg %p53
        $region26: #{tpu_custom_call.1} parent=23 // pred_check_branch
          %209 = sbr.rel (%p207) target = $region28
        $region27: #{tpu_custom_call.1} parent=23 // pred_region
          %s210 = sand.u32 %s43, 1
          %s211 = scalar_lea.sflag [#allocation3], %s210
          %s212 = sand.u32 %s43, 1
          %s213 = smul.addr %s212, 128
          %s214 = scalar_lea.vmem [#allocation2], %s213
          %s215 = smul.u32 32, %s28
          %s217 = ssub.s32 2048, 2048
          %218 = vsyncadd %s211, %s217
          %s219 = smul.addr %s215, 64
          %s220 = scalar_lea.hbm %s0, %s219
          %s221 = sshll.u32 %s214, 4
          %s222 = int_to_ptr.vmem [resolvable:$true] %s221
          %227 = dma.hbm_to_vmem [thread:$0]  %s220, 2048, %s222, %s211, 64, 64, 4
        $region28: #{tpu_custom_call.1} parent=23 // pred_fallthru
          _
      $region24: #{tpu_custom_call.1} parent=5 // pred_fallthru
        _
      %p228 = scmp.le.s32.totalorder 1, %s21
      %p229 = scmp.lt.s32.totalorder %s21, 3
      %p230 = pnand %p228, %p229
      %p231 = pneg %p230
      // Predicated region
      $region29: #{tpu_custom_call.1} parent=5 // pred_check
        _
      $region30: #{tpu_custom_call.1} parent=5 // pred_check_branch
        %233 = sbr.rel (%p230) target = $region32
      $region31: #{tpu_custom_call.1} parent=5 // pred_region
        %s234 = ssub.s32 %s21, 1
        %s235 = sand.u32 %s46, 1
        %s236 = scalar_lea.sflag [#allocation3], %s235
        %s237 = sand.u32 %s46, 1
        %s238 = smul.addr %s237, 128
        %s239 = scalar_lea.vmem [#allocation2], %s238
        // Predicated region
        $region33: #{tpu_custom_call.1} parent=31 // pred_check
          %p240 = pneg %p59
        $region34: #{tpu_custom_call.1} parent=31 // pred_check_branch
          %242 = sbr.rel (%p240) target = $region36
        $region35: #{tpu_custom_call.1} parent=31 // pred_region
          %243 = dma.done %s236, 2048
        $region36: #{tpu_custom_call.1} parent=31 // pred_fallthru
          _
        // Predicated region
        $region37: #{tpu_custom_call.1} parent=31 // pred_check
          %p244 = pneg %p85
        $region38: #{tpu_custom_call.1} parent=31 // pred_check_branch
          %246 = sbr.rel (%p244) target = $region40
        $region39: #{tpu_custom_call.1} parent=31 // pred_region
          %247 = dma.done [#allocation6], 1024
        $region40: #{tpu_custom_call.1} parent=31 // pred_fallthru
          _
        %s248 = sand.u32 %s46, 1
        %s249 = scalar_lea.sflag [#allocation3], %s248
        %s250 = sand.u32 %s46, 1
        %s251 = smul.addr %s250, 128
        %s252 = scalar_lea.vmem [#allocation2], %s251
        %p253 = pneg %p59
        %p254 = pneg %p56
        %p255 = pneg %p85
        %p256 = pneg %p82
        %p257 = scmp.lt.s32.totalorder %s31, 0
        %s258 = scalar_select %p257, %s31, 0
        %s259 = scalar_lea.vmem %s2, %s258
        %p260 = pneg %p111
        %p261 = pneg %p108
        %p262 = pneg %p139
        %p263 = pneg %p136
        %s264 = sand.u32 %s126, 1
        %s265 = scalar_lea.sflag [#allocation4], %s264
        %s266 = sand.u32 %s126, 1
        %s267 = smul.addr %s266, 256
        %s268 = scalar_lea.vmem [#allocation7], %s267
        %p269 = pneg %p167
        %p270 = pneg %p164
        %s271 = sand.u32 %s154, 1
        %s272 = scalar_lea.sflag [#allocation9], %s271
        %s273 = sand.u32 %s154, 1
        %s274 = smul.addr %s273, 8
        %s275 = scalar_lea.vmem [#allocation8], %s274
        %s276 = smul.u32 32, %s30
        %p277 = scmp.lt.s32.totalorder %s31, 0
        %s278 = scalar_select %p277, %s31, 0
        %s279 = scalar_lea.vmem %s2, %s278
        %s280 = smul.u32 32, %s30
        %v282 = vld [vmem:[%s239] sm:$0xf]
        %v283 = vld [vmem:[%s239 + $0x4] sm:$0xf]
        %v284 = vld [vmem:[%s239 + $0x8] sm:$0xf]
        %v285 = vld [vmem:[%s239 + $0xc] sm:$0xf]
        %v286 = vld [vmem:[%s239 + $0x10] sm:$0xf]
        %v287 = vld [vmem:[%s239 + $0x14] sm:$0xf]
        %v288 = vld [vmem:[%s239 + $0x18] sm:$0xf]
        %v289 = vld [vmem:[%s239 + $0x1c] sm:$0xf]
        %v290 = vld [vmem:[%s239 + $0x20] sm:$0xf]
        %v291 = vld [vmem:[%s239 + $0x24] sm:$0xf]
        %v292 = vld [vmem:[%s239 + $0x28] sm:$0xf]
        %v293 = vld [vmem:[%s239 + $0x2c] sm:$0xf]
        %v294 = vld [vmem:[%s239 + $0x30] sm:$0xf]
        %v295 = vld [vmem:[%s239 + $0x34] sm:$0xf]
        %v296 = vld [vmem:[%s239 + $0x38] sm:$0xf]
        %v297 = vld [vmem:[%s239 + $0x3c] sm:$0xf]
        %v298 = vld [vmem:[%s239 + $0x40] sm:$0xf]
        %v299 = vld [vmem:[%s239 + $0x44] sm:$0xf]
        %v300 = vld [vmem:[%s239 + $0x48] sm:$0xf]
        %v301 = vld [vmem:[%s239 + $0x4c] sm:$0xf]
        %v302 = vld [vmem:[%s239 + $0x50] sm:$0xf]
        %v303 = vld [vmem:[%s239 + $0x54] sm:$0xf]
        %v304 = vld [vmem:[%s239 + $0x58] sm:$0xf]
        %v305 = vld [vmem:[%s239 + $0x5c] sm:$0xf]
        %v306 = vld [vmem:[%s239 + $0x60] sm:$0xf]
        %v307 = vld [vmem:[%s239 + $0x64] sm:$0xf]
        %v308 = vld [vmem:[%s239 + $0x68] sm:$0xf]
        %v309 = vld [vmem:[%s239 + $0x6c] sm:$0xf]
        %v310 = vld [vmem:[%s239 + $0x70] sm:$0xf]
        %v311 = vld [vmem:[%s239 + $0x74] sm:$0xf]
        %v312 = vld [vmem:[%s239 + $0x78] sm:$0xf]
        %v313 = vld [vmem:[%s239 + $0x7c] sm:$0xf]
        %v314 = vld [vmem:[#allocation5] sm:$0xf]
        %v315 = vld [vmem:[#allocation5 + $0x4] sm:$0xf]
        %v316 = vld [vmem:[#allocation5 + $0x8] sm:$0xf]
        %v317 = vld [vmem:[#allocation5 + $0xc] sm:$0xf]
        %v318 = vld [vmem:[#allocation5 + $0x10] sm:$0xf]
        %v319 = vld [vmem:[#allocation5 + $0x14] sm:$0xf]
        %v320 = vld [vmem:[#allocation5 + $0x18] sm:$0xf]
        %v321 = vld [vmem:[#allocation5 + $0x1c] sm:$0xf]
        %v322 = vld [vmem:[#allocation5 + $0x20] sm:$0xf]
        %v323 = vld [vmem:[#allocation5 + $0x24] sm:$0xf]
        %v324 = vld [vmem:[#allocation5 + $0x28] sm:$0xf]
        %v325 = vld [vmem:[#allocation5 + $0x2c] sm:$0xf]
        %v326 = vld [vmem:[#allocation5 + $0x30] sm:$0xf]
        %v327 = vld [vmem:[#allocation5 + $0x34] sm:$0xf]
        %v328 = vld [vmem:[#allocation5 + $0x38] sm:$0xf]
        %v329 = vld [vmem:[#allocation5 + $0x3c] sm:$0xf]
        %v330 = vld [vmem:[%s279] sm:$0x1]
        %v332 = vlaneseq
        %v333 = vshrl.u32 %v332, 7
        %v334 = vsub.s32 0, %v333
        %v335 = vrot.slane %v330, %v334
        %v369 = vunpack.c.l.b16 %v282
        %v370 = vunpack.c.l.b16 %v283
        %v371 = vunpack.c.l.b16 %v284
        %v372 = vunpack.c.l.b16 %v285
        %v373 = vunpack.c.l.b16 %v286
        %v374 = vunpack.c.l.b16 %v287
        %v375 = vunpack.c.l.b16 %v288
        %v376 = vunpack.c.l.b16 %v289
        %v377 = vunpack.c.l.b16 %v290
        %v378 = vunpack.c.l.b16 %v291
        %v379 = vunpack.c.l.b16 %v292
        %v380 = vunpack.c.l.b16 %v293
        %v381 = vunpack.c.l.b16 %v294
        %v382 = vunpack.c.l.b16 %v295
        %v383 = vunpack.c.l.b16 %v296
        %v384 = vunpack.c.l.b16 %v297
        %v385 = vunpack.c.l.b16 %v298
        %v386 = vunpack.c.l.b16 %v299
        %v387 = vunpack.c.l.b16 %v300
        %v388 = vunpack.c.l.b16 %v301
        %v389 = vunpack.c.l.b16 %v302
        %v390 = vunpack.c.l.b16 %v303
        %v391 = vunpack.c.l.b16 %v304
        %v392 = vunpack.c.l.b16 %v305
        %v393 = vunpack.c.l.b16 %v306
        %v394 = vunpack.c.l.b16 %v307
        %v395 = vunpack.c.l.b16 %v308
        %v396 = vunpack.c.l.b16 %v309
        %v397 = vunpack.c.l.b16 %v310
        %v398 = vunpack.c.l.b16 %v311
        %v399 = vunpack.c.l.b16 %v312
        %v400 = vunpack.c.l.b16 %v313
        %v401 = vpack.c.b16 %v370, %v369
        %v402 = vpack.c.b16 %v372, %v371
        %v403 = vpack.c.b16 %v374, %v373
        %v404 = vpack.c.b16 %v376, %v375
        %v405 = vpack.c.b16 %v378, %v377
        %v406 = vpack.c.b16 %v380, %v379
        %v407 = vpack.c.b16 %v382, %v381
        %v408 = vpack.c.b16 %v384, %v383
        %v409 = vpack.c.b16 %v386, %v385
        %v410 = vpack.c.b16 %v388, %v387
        %v411 = vpack.c.b16 %v390, %v389
        %v412 = vpack.c.b16 %v392, %v391
        %v413 = vpack.c.b16 %v394, %v393
        %v414 = vpack.c.b16 %v396, %v395
        %v415 = vpack.c.b16 %v398, %v397
        %v416 = vpack.c.b16 %v400, %v399
        %v449 = vunpack.c.l.b16 %v314
        %v450 = vunpack.c.l.b16 %v315
        %v451 = vunpack.c.l.b16 %v316
        %v452 = vunpack.c.l.b16 %v317
        %v453 = vunpack.c.l.b16 %v318
        %v454 = vunpack.c.l.b16 %v319
        %v455 = vunpack.c.l.b16 %v320
        %v456 = vunpack.c.l.b16 %v321
        %v457 = vunpack.c.l.b16 %v322
        %v458 = vunpack.c.l.b16 %v323
        %v459 = vunpack.c.l.b16 %v324
        %v460 = vunpack.c.l.b16 %v325
        %v461 = vunpack.c.l.b16 %v326
        %v462 = vunpack.c.l.b16 %v327
        %v463 = vunpack.c.l.b16 %v328
        %v464 = vunpack.c.l.b16 %v329
        %v465 = vpack.c.b16 %v450, %v449
        %v466 = vpack.c.b16 %v452, %v451
        %v467 = vpack.c.b16 %v454, %v453
        %v468 = vpack.c.b16 %v456, %v455
        %v469 = vpack.c.b16 %v458, %v457
        %v470 = vpack.c.b16 %v460, %v459
        %v471 = vpack.c.b16 %v462, %v461
        %v472 = vpack.c.b16 %v464, %v463
        %481 = vmatprep.subr.bf16.mxu0 0
        %482 = vmatpush1.bf16.msra.mxu0 %v472
        %483 = vmatprep.subr.bf16.mxu0 0
        %484 = vmatpush1.bf16.msra.mxu0 %v471
        %485 = vmatprep.subr.bf16.mxu0 0
        %486 = vmatpush1.bf16.msra.mxu0 %v470
        %487 = vmatprep.subr.bf16.mxu0 0
        %488 = vmatpush1.bf16.msra.mxu0 %v469
        %489 = vmatprep.subr.bf16.mxu0 0
        %490 = vmatpush1.bf16.msra.mxu0 %v468
        %491 = vmatprep.subr.bf16.mxu0 0
        %492 = vmatpush1.bf16.msra.mxu0 %v467
        %493 = vmatprep.subr.bf16.mxu0 0
        %494 = vmatpush1.bf16.msra.mxu0 %v466
        %495 = vmatprep.subr.bf16.mxu0 0
        %496 = vmatpush1.bf16.msra.mxu0 %v465
        %497 = vmatprep.subr.bf16.mxu0 0
        %498 = vmatpush2.bf16.msra.mxu0 0
        %499 = vmatprep.subr.bf16.mxu0 0
        %500 = vmatpush2.bf16.msra.mxu0 0
        %501 = vmatprep.subr.bf16.mxu0 0
        %502 = vmatpush2.bf16.msra.mxu0 0
        %503 = vmatprep.subr.bf16.mxu0 0
        %504 = vmatpush2.bf16.msra.mxu0 0
        %505 = vmatprep.subr.bf16.mxu0 0
        %506 = vmatpush2.bf16.msra.mxu0 0
        %507 = vmatprep.subr.bf16.mxu0 0
        %508 = vmatpush2.bf16.msra.mxu0 0
        %509 = vmatprep.subr.bf16.mxu0 0
        %510 = vmatpush2.bf16.msra.mxu0 0
        %511 = vmatprep.subr.bf16.mxu0 0
        %512 = vmatpush2.bf16.msra.mxu0 0
        %513 = vmatprep.mubr.bf16.mxu0 0
        %514 = vmatmul.mubr.bf16.gmra.mxu0 %v401
        %v515 = vpop.f32.mrf.mxu0
        %v516 = vadd.f32 %v335, %v515
        %v517 = vpop.f32.mrf.mxu0
        %v518 = vpop.f32.mrf.mxu0
        %v519 = vadd.f32 %v335, %v518
        %v520 = vpop.f32.mrf.mxu0
        %521 = vmatprep.mubr.bf16.mxu0 0
        %522 = vmatmul.mubr.bf16.gmra.mxu0 %v402
        %v523 = vpop.f32.mrf.mxu0
        %v524 = vadd.f32 %v335, %v523
        %v525 = vpop.f32.mrf.mxu0
        %v526 = vpop.f32.mrf.mxu0
        %v527 = vadd.f32 %v335, %v526
        %v528 = vpop.f32.mrf.mxu0
        %529 = vmatprep.mubr.bf16.mxu0 0
        %530 = vmatmul.mubr.bf16.gmra.mxu0 %v403
        %v531 = vpop.f32.mrf.mxu0
        %v532 = vadd.f32 %v335, %v531
        %v533 = vpop.f32.mrf.mxu0
        %v534 = vpop.f32.mrf.mxu0
        %v535 = vadd.f32 %v335, %v534
        %v536 = vpop.f32.mrf.mxu0
        %537 = vmatprep.mubr.bf16.mxu0 0
        %538 = vmatmul.mubr.bf16.gmra.mxu0 %v404
        %v539 = vpop.f32.mrf.mxu0
        %v540 = vadd.f32 %v335, %v539
        %v541 = vpop.f32.mrf.mxu0
        %v542 = vpop.f32.mrf.mxu0
        %v543 = vadd.f32 %v335, %v542
        %v544 = vpop.f32.mrf.mxu0
        %545 = vmatprep.mubr.bf16.mxu0 0
        %546 = vmatmul.mubr.bf16.gmra.mxu0 %v405
        %v547 = vpop.f32.mrf.mxu0
        %v548 = vadd.f32 %v335, %v547
        %v549 = vpop.f32.mrf.mxu0
        %v550 = vpop.f32.mrf.mxu0
        %v551 = vadd.f32 %v335, %v550
        %v552 = vpop.f32.mrf.mxu0
        %553 = vmatprep.mubr.bf16.mxu0 0
        %554 = vmatmul.mubr.bf16.gmra.mxu0 %v406
        %v555 = vpop.f32.mrf.mxu0
        %v556 = vadd.f32 %v335, %v555
        %v557 = vpop.f32.mrf.mxu0
        %v558 = vpop.f32.mrf.mxu0
        %v559 = vadd.f32 %v335, %v558
        %v560 = vpop.f32.mrf.mxu0
        %561 = vmatprep.mubr.bf16.mxu0 0
        %562 = vmatmul.mubr.bf16.gmra.mxu0 %v407
        %v563 = vpop.f32.mrf.mxu0
        %v564 = vadd.f32 %v335, %v563
        %v565 = vpop.f32.mrf.mxu0
        %v566 = vpop.f32.mrf.mxu0
        %v567 = vadd.f32 %v335, %v566
        %v568 = vpop.f32.mrf.mxu0
        %569 = vmatprep.mubr.bf16.mxu0 0
        %570 = vmatmul.mubr.bf16.gmra.mxu0 %v408
        %v571 = vpop.f32.mrf.mxu0
        %v572 = vadd.f32 %v335, %v571
        %v573 = vpop.f32.mrf.mxu0
        %v574 = vpop.f32.mrf.mxu0
        %v575 = vadd.f32 %v335, %v574
        %v576 = vpop.f32.mrf.mxu0
        %577 = vmatprep.mubr.bf16.mxu0 0
        %578 = vmatmul.mubr.bf16.gmra.mxu0 %v409
        %v579 = vpop.f32.mrf.mxu0
        %v580 = vadd.f32 %v335, %v579
        %v581 = vpop.f32.mrf.mxu0
        %v582 = vpop.f32.mrf.mxu0
        %v583 = vadd.f32 %v335, %v582
        %v584 = vpop.f32.mrf.mxu0
        %585 = vmatprep.mubr.bf16.mxu0 0
        %586 = vmatmul.mubr.bf16.gmra.mxu0 %v410
        %v587 = vpop.f32.mrf.mxu0
        %v588 = vadd.f32 %v335, %v587
        %v589 = vpop.f32.mrf.mxu0
        %v590 = vpop.f32.mrf.mxu0
        %v591 = vadd.f32 %v335, %v590
        %v592 = vpop.f32.mrf.mxu0
        %593 = vmatprep.mubr.bf16.mxu0 0
        %594 = vmatmul.mubr.bf16.gmra.mxu0 %v411
        %v595 = vpop.f32.mrf.mxu0
        %v596 = vadd.f32 %v335, %v595
        %v597 = vpop.f32.mrf.mxu0
        %v598 = vpop.f32.mrf.mxu0
        %v599 = vadd.f32 %v335, %v598
        %v600 = vpop.f32.mrf.mxu0
        %601 = vmatprep.mubr.bf16.mxu0 0
        %602 = vmatmul.mubr.bf16.gmra.mxu0 %v412
        %v603 = vpop.f32.mrf.mxu0
        %v604 = vadd.f32 %v335, %v603
        %v605 = vpop.f32.mrf.mxu0
        %v606 = vpop.f32.mrf.mxu0
        %v607 = vadd.f32 %v335, %v606
        %v608 = vpop.f32.mrf.mxu0
        %609 = vmatprep.mubr.bf16.mxu0 0
        %610 = vmatmul.mubr.bf16.gmra.mxu0 %v413
        %v611 = vpop.f32.mrf.mxu0
        %v612 = vadd.f32 %v335, %v611
        %v613 = vpop.f32.mrf.mxu0
        %v614 = vpop.f32.mrf.mxu0
        %v615 = vadd.f32 %v335, %v614
        %v616 = vpop.f32.mrf.mxu0
        %617 = vmatprep.mubr.bf16.mxu0 0
        %618 = vmatmul.mubr.bf16.gmra.mxu0 %v414
        %v619 = vpop.f32.mrf.mxu0
        %v620 = vadd.f32 %v335, %v619
        %v621 = vpop.f32.mrf.mxu0
        %v622 = vpop.f32.mrf.mxu0
        %v623 = vadd.f32 %v335, %v622
        %v624 = vpop.f32.mrf.mxu0
        %625 = vmatprep.mubr.bf16.mxu0 0
        %626 = vmatmul.mubr.bf16.gmra.mxu0 %v415
        %v627 = vpop.f32.mrf.mxu0
        %v628 = vadd.f32 %v335, %v627
        %v629 = vpop.f32.mrf.mxu0
        %v630 = vpop.f32.mrf.mxu0
        %v631 = vadd.f32 %v335, %v630
        %v632 = vpop.f32.mrf.mxu0
        %633 = vmatprep.mubr.bf16.mxu0 0
        %634 = vmatmul.mubr.bf16.gmra.mxu0 %v416
        %v635 = vpop.f32.mrf.mxu0
        %v636 = vadd.f32 %v335, %v635
        %v637 = vpop.f32.mrf.mxu0
        %v638 = vpop.f32.mrf.mxu0
        %v639 = vadd.f32 %v335, %v638
        %v640 = vpop.f32.mrf.mxu0
        %641 = vdwg.mxu0
        %642 = vst [vmem:[%s268] sm:$0xff] %v516
        %643 = vst [vmem:[%s268 + $0x8] sm:$0xff] %v519
        %644 = vst [vmem:[%s268 + $0x10] sm:$0xff] %v524
        %645 = vst [vmem:[%s268 + $0x18] sm:$0xff] %v527
        %646 = vst [vmem:[%s268 + $0x20] sm:$0xff] %v532
        %647 = vst [vmem:[%s268 + $0x28] sm:$0xff] %v535
        %648 = vst [vmem:[%s268 + $0x30] sm:$0xff] %v540
        %649 = vst [vmem:[%s268 + $0x38] sm:$0xff] %v543
        %650 = vst [vmem:[%s268 + $0x40] sm:$0xff] %v548
        %651 = vst [vmem:[%s268 + $0x48] sm:$0xff] %v551
        %652 = vst [vmem:[%s268 + $0x50] sm:$0xff] %v556
        %653 = vst [vmem:[%s268 + $0x58] sm:$0xff] %v559
        %654 = vst [vmem:[%s268 + $0x60] sm:$0xff] %v564
        %655 = vst [vmem:[%s268 + $0x68] sm:$0xff] %v567
        %656 = vst [vmem:[%s268 + $0x70] sm:$0xff] %v572
        %657 = vst [vmem:[%s268 + $0x78] sm:$0xff] %v575
        %658 = vst [vmem:[%s268 + $0x80] sm:$0xff] %v580
        %659 = vst [vmem:[%s268 + $0x88] sm:$0xff] %v583
        %660 = vst [vmem:[%s268 + $0x90] sm:$0xff] %v588
        %661 = vst [vmem:[%s268 + $0x98] sm:$0xff] %v591
        %662 = vst [vmem:[%s268 + $0xa0] sm:$0xff] %v596
        %663 = vst [vmem:[%s268 + $0xa8] sm:$0xff] %v599
        %664 = vst [vmem:[%s268 + $0xb0] sm:$0xff] %v604
        %665 = vst [vmem:[%s268 + $0xb8] sm:$0xff] %v607
        %666 = vst [vmem:[%s268 + $0xc0] sm:$0xff] %v612
        %667 = vst [vmem:[%s268 + $0xc8] sm:$0xff] %v615
        %668 = vst [vmem:[%s268 + $0xd0] sm:$0xff] %v620
        %669 = vst [vmem:[%s268 + $0xd8] sm:$0xff] %v623
        %670 = vst [vmem:[%s268 + $0xe0] sm:$0xff] %v628
        %671 = vst [vmem:[%s268 + $0xe8] sm:$0xff] %v631
        %672 = vst [vmem:[%s268 + $0xf0] sm:$0xff] %v636
        %673 = vst [vmem:[%s268 + $0xf8] sm:$0xff] %v639
        %s674 = smul.u32 %s30, 256
        %v675 = vlaneseq
        %v676 = vshrl.u32 %v675, 7
        %v677 = vadd.s32 %v676, 8
        %v678 = vadd.s32 %v676, 16
        %v679 = vadd.s32 %v676, 24
        %v680 = vadd.s32 %v676, 32
        %v681 = vadd.s32 %v676, 40
        %v682 = vadd.s32 %v676, 48
        %v683 = vadd.s32 %v676, 56
        %v684 = vadd.s32 %v676, 64
        %v685 = vadd.s32 %v676, 72
        %v686 = vadd.s32 %v676, 80
        %v687 = vadd.s32 %v676, 88
        %v688 = vadd.s32 %v676, 96
        %v689 = vadd.s32 %v676, 104
        %v690 = vadd.s32 %v676, 112
        %v691 = vadd.s32 %v676, 120
        %v692 = vadd.s32 %v676, 128
        %v693 = vadd.s32 %v676, 136
        %v694 = vadd.s32 %v676, 144
        %v695 = vadd.s32 %v676, 152
        %v696 = vadd.s32 %v676, 160
        %v697 = vadd.s32 %v676, 168
        %v698 = vadd.s32 %v676, 176
        %v699 = vadd.s32 %v676, 184
        %v700 = vadd.s32 %v676, 192
        %v701 = vadd.s32 %v676, 200
        %v702 = vadd.s32 %v676, 208
        %v703 = vadd.s32 %v676, 216
        %v704 = vadd.s32 %v676, 224
        %v705 = vadd.s32 %v676, 232
        %v706 = vadd.s32 %v676, 240
        %v707 = vadd.s32 %v676, 248
        %v708 = vstv %s674
        %v709 = vadd.s32 %v708, %v676
        %v710 = vadd.s32 %v708, %v677
        %v711 = vadd.s32 %v708, %v678
        %v712 = vadd.s32 %v708, %v679
        %v713 = vadd.s32 %v708, %v680
        %v714 = vadd.s32 %v708, %v681
        %v715 = vadd.s32 %v708, %v682
        %v716 = vadd.s32 %v708, %v683
        %v717 = vadd.s32 %v708, %v684
        %v718 = vadd.s32 %v708, %v685
        %v719 = vadd.s32 %v708, %v686
        %v720 = vadd.s32 %v708, %v687
        %v721 = vadd.s32 %v708, %v688
        %v722 = vadd.s32 %v708, %v689
        %v723 = vadd.s32 %v708, %v690
        %v724 = vadd.s32 %v708, %v691
        %v725 = vadd.s32 %v708, %v692
        %v726 = vadd.s32 %v708, %v693
        %v727 = vadd.s32 %v708, %v694
        %v728 = vadd.s32 %v708, %v695
        %v729 = vadd.s32 %v708, %v696
        %v730 = vadd.s32 %v708, %v697
        %v731 = vadd.s32 %v708, %v698
        %v732 = vadd.s32 %v708, %v699
        %v733 = vadd.s32 %v708, %v700
        %v734 = vadd.s32 %v708, %v701
        %v735 = vadd.s32 %v708, %v702
        %v736 = vadd.s32 %v708, %v703
        %v737 = vadd.s32 %v708, %v704
        %v738 = vadd.s32 %v708, %v705
        %v739 = vadd.s32 %v708, %v706
        %v740 = vadd.s32 %v708, %v707
        %vm741 = vcmp.lt.s32.totalorder %v709, 392
        %vm742 = vcmp.lt.s32.totalorder %v710, 392
        %vm743 = vcmp.lt.s32.totalorder %v711, 392
        %vm744 = vcmp.lt.s32.totalorder %v712, 392
        %vm745 = vcmp.lt.s32.totalorder %v713, 392
        %vm746 = vcmp.lt.s32.totalorder %v714, 392
        %vm747 = vcmp.lt.s32.totalorder %v715, 392
        %vm748 = vcmp.lt.s32.totalorder %v716, 392
        %vm749 = vcmp.lt.s32.totalorder %v717, 392
        %vm750 = vcmp.lt.s32.totalorder %v718, 392
        %vm751 = vcmp.lt.s32.totalorder %v719, 392
        %vm752 = vcmp.lt.s32.totalorder %v720, 392
        %vm753 = vcmp.lt.s32.totalorder %v721, 392
        %vm754 = vcmp.lt.s32.totalorder %v722, 392
        %vm755 = vcmp.lt.s32.totalorder %v723, 392
        %vm756 = vcmp.lt.s32.totalorder %v724, 392
        %vm757 = vcmp.lt.s32.totalorder %v725, 392
        %vm758 = vcmp.lt.s32.totalorder %v726, 392
        %vm759 = vcmp.lt.s32.totalorder %v727, 392
        %vm760 = vcmp.lt.s32.totalorder %v728, 392
        %vm761 = vcmp.lt.s32.totalorder %v729, 392
        %vm762 = vcmp.lt.s32.totalorder %v730, 392
        %vm763 = vcmp.lt.s32.totalorder %v731, 392
        %vm764 = vcmp.lt.s32.totalorder %v732, 392
        %vm765 = vcmp.lt.s32.totalorder %v733, 392
        %vm766 = vcmp.lt.s32.totalorder %v734, 392
        %vm767 = vcmp.lt.s32.totalorder %v735, 392
        %vm768 = vcmp.lt.s32.totalorder %v736, 392
        %vm769 = vcmp.lt.s32.totalorder %v737, 392
        %vm770 = vcmp.lt.s32.totalorder %v738, 392
        %vm771 = vcmp.lt.s32.totalorder %v739, 392
        %vm772 = vcmp.lt.s32.totalorder %v740, 392
        %v773 = vsel %vm741, %v516, 0.0
        %v774 = vsel %vm742, %v519, 0.0
        %v775 = vsel %vm743, %v524, 0.0
        %v776 = vsel %vm744, %v527, 0.0
        %v777 = vsel %vm745, %v532, 0.0
        %v778 = vsel %vm746, %v535, 0.0
        %v779 = vsel %vm747, %v540, 0.0
        %v780 = vsel %vm748, %v543, 0.0
        %v781 = vsel %vm749, %v548, 0.0
        %v782 = vsel %vm750, %v551, 0.0
        %v783 = vsel %vm751, %v556, 0.0
        %v784 = vsel %vm752, %v559, 0.0
        %v785 = vsel %vm753, %v564, 0.0
        %v786 = vsel %vm754, %v567, 0.0
        %v787 = vsel %vm755, %v572, 0.0
        %v788 = vsel %vm756, %v575, 0.0
        %v789 = vsel %vm757, %v580, 0.0
        %v790 = vsel %vm758, %v583, 0.0
        %v791 = vsel %vm759, %v588, 0.0
        %v792 = vsel %vm760, %v591, 0.0
        %v793 = vsel %vm761, %v596, 0.0
        %v794 = vsel %vm762, %v599, 0.0
        %v795 = vsel %vm763, %v604, 0.0
        %v796 = vsel %vm764, %v607, 0.0
        %v797 = vsel %vm765, %v612, 0.0
        %v798 = vsel %vm766, %v615, 0.0
        %v799 = vsel %vm767, %v620, 0.0
        %v800 = vsel %vm768, %v623, 0.0
        %v801 = vsel %vm769, %v628, 0.0
        %v802 = vsel %vm770, %v631, 0.0
        %v803 = vsel %vm771, %v636, 0.0
        %v804 = vsel %vm772, %v639, 0.0
        %v805 = vadd.f32 %v773, %v774
        %v806 = vadd.f32 %v805, %v775
        %v807 = vadd.f32 %v806, %v776
        %v808 = vadd.f32 %v807, %v777
        %v809 = vadd.f32 %v808, %v778
        %v810 = vadd.f32 %v809, %v779
        %v811 = vadd.f32 %v810, %v780
        %v812 = vadd.f32 %v811, %v781
        %v813 = vadd.f32 %v812, %v782
        %v814 = vadd.f32 %v813, %v783
        %v815 = vadd.f32 %v814, %v784
        %v816 = vadd.f32 %v815, %v785
        %v817 = vadd.f32 %v816, %v786
        %v818 = vadd.f32 %v817, %v787
        %v819 = vadd.f32 %v818, %v788
        %v820 = vadd.f32 %v819, %v789
        %v821 = vadd.f32 %v820, %v790
        %v822 = vadd.f32 %v821, %v791
        %v823 = vadd.f32 %v822, %v792
        %v824 = vadd.f32 %v823, %v793
        %v825 = vadd.f32 %v824, %v794
        %v826 = vadd.f32 %v825, %v795
        %v827 = vadd.f32 %v826, %v796
        %v828 = vadd.f32 %v827, %v797
        %v829 = vadd.f32 %v828, %v798
        %v830 = vadd.f32 %v829, %v799
        %v831 = vadd.f32 %v830, %v800
        %v832 = vadd.f32 %v831, %v801
        %v833 = vadd.f32 %v832, %v802
        %v834 = vadd.f32 %v833, %v803
        %v835 = vadd.f32 %v834, %v804
        %v836 = vrot.slane %v835, 4
        %v837 = vadd.f32 %v835, %v836
        %v838 = vrot.slane %v837, 2
        %v839 = vadd.f32 %v837, %v838
        %v840 = vrot.slane %v839, 1
        %v841 = vadd.f32 %v839, %v840
        %v842 = vmul.f32 %v773, %v773
        %v843 = vmul.f32 %v774, %v774
        %v844 = vmul.f32 %v775, %v775
        %v845 = vmul.f32 %v776, %v776
        %v846 = vmul.f32 %v777, %v777
        %v847 = vmul.f32 %v778, %v778
        %v848 = vmul.f32 %v779, %v779
        %v849 = vmul.f32 %v780, %v780
        %v850 = vmul.f32 %v781, %v781
        %v851 = vmul.f32 %v782, %v782
        %v852 = vmul.f32 %v783, %v783
        %v853 = vmul.f32 %v784, %v784
        %v854 = vmul.f32 %v785, %v785
        %v855 = vmul.f32 %v786, %v786
        %v856 = vmul.f32 %v787, %v787
        %v857 = vmul.f32 %v788, %v788
        %v858 = vmul.f32 %v789, %v789
        %v859 = vmul.f32 %v790, %v790
        %v860 = vmul.f32 %v791, %v791
        %v861 = vmul.f32 %v792, %v792
        %v862 = vmul.f32 %v793, %v793
        %v863 = vmul.f32 %v794, %v794
        %v864 = vmul.f32 %v795, %v795
        %v865 = vmul.f32 %v796, %v796
        %v866 = vmul.f32 %v797, %v797
        %v867 = vmul.f32 %v798, %v798
        %v868 = vmul.f32 %v799, %v799
        %v869 = vmul.f32 %v800, %v800
        %v870 = vmul.f32 %v801, %v801
        %v871 = vmul.f32 %v802, %v802
        %v872 = vmul.f32 %v803, %v803
        %v873 = vmul.f32 %v804, %v804
        %v874 = vadd.f32 %v842, %v843
        %v875 = vadd.f32 %v874, %v844
        %v876 = vadd.f32 %v875, %v845
        %v877 = vadd.f32 %v876, %v846
        %v878 = vadd.f32 %v877, %v847
        %v879 = vadd.f32 %v878, %v848
        %v880 = vadd.f32 %v879, %v849
        %v881 = vadd.f32 %v880, %v850
        %v882 = vadd.f32 %v881, %v851
        %v883 = vadd.f32 %v882, %v852
        %v884 = vadd.f32 %v883, %v853
        %v885 = vadd.f32 %v884, %v854
        %v886 = vadd.f32 %v885, %v855
        %v887 = vadd.f32 %v886, %v856
        %v888 = vadd.f32 %v887, %v857
        %v889 = vadd.f32 %v888, %v858
        %v890 = vadd.f32 %v889, %v859
        %v891 = vadd.f32 %v890, %v860
        %v892 = vadd.f32 %v891, %v861
        %v893 = vadd.f32 %v892, %v862
        %v894 = vadd.f32 %v893, %v863
        %v895 = vadd.f32 %v894, %v864
        %v896 = vadd.f32 %v895, %v865
        %v897 = vadd.f32 %v896, %v866
        %v898 = vadd.f32 %v897, %v867
        %v899 = vadd.f32 %v898, %v868
        %v900 = vadd.f32 %v899, %v869
        %v901 = vadd.f32 %v900, %v870
        %v902 = vadd.f32 %v901, %v871
        %v903 = vadd.f32 %v902, %v872
        %v904 = vadd.f32 %v903, %v873
        %v905 = vrot.slane %v904, 4
        %v906 = vadd.f32 %v904, %v905
        %v907 = vrot.slane %v906, 2
        %v908 = vadd.f32 %v906, %v907
        %v909 = vrot.slane %v908, 1
        %v910 = vadd.f32 %v908, %v909
        %vm911 = vcmask 1040384
        %v912 = vsel %vm911, %v841, %v910
        %vm913 = vcmask 1041408
        %v914 = vsel %vm913, %v912, 0.0
        %915 = vst [vmem:[%s275] sm:$0xff] %v914
        %s916 = sand.u32 %s126, 1
        %s917 = scalar_lea.sflag [#allocation4], %s916
        %s918 = sand.u32 %s126, 1
        %s919 = smul.addr %s918, 256
        %s920 = scalar_lea.vmem [#allocation7], %s919
        %s921 = sand.u32 %s154, 1
        %s922 = scalar_lea.sflag [#allocation9], %s921
        %s923 = sand.u32 %s154, 1
        %s924 = smul.addr %s923, 8
        %s925 = scalar_lea.vmem [#allocation8], %s924
        // Predicated region
        $region41: #{tpu_custom_call.1} parent=31 // pred_check
          %p926 = pneg %p136
        $region42: #{tpu_custom_call.1} parent=31 // pred_check_branch
          %928 = sbr.rel (%p926) target = $region44
        $region43: #{tpu_custom_call.1} parent=31 // pred_region
          %s929 = smul.u32 32, %s30
          %s931 = ssub.s32 4096, 4096
          %932 = vsyncadd %s917, %s931
          %s933 = sadd.s32 %s31, %s929
          %s934 = smul.addr %s933, 128
          %s935 = scalar_lea.hbm %s3, %s934
          %s936 = sshll.u32 %s920, 4
          %s937 = int_to_ptr.vmem [resolvable:$true] %s936
          %942 = dma.vmem_to_hbm [thread:$0]  %s937, 4096, %s935, %s917, 128, 128, 8
        $region44: #{tpu_custom_call.1} parent=31 // pred_fallthru
          _
        // Predicated region
        $region45: #{tpu_custom_call.1} parent=31 // pred_check
          %p943 = pneg %p164
        $region46: #{tpu_custom_call.1} parent=31 // pred_check_branch
          %945 = sbr.rel (%p943) target = $region48
        $region47: #{tpu_custom_call.1} parent=31 // pred_region
          %s947 = ssub.s32 128, 128
          %948 = vsyncadd %s922, %s947
          %s949 = sadd.s32 %s31, %s30
          %s950 = smul.addr %s949, 128
          %s951 = scalar_lea.hbm %s4, %s950
          %s953 = sshll.u32 %s925, 4
          %s954 = int_to_ptr.vmem [resolvable:$true] %s953
          %956 = dma.vmem_to_hbm [thread:$0]  %s954, 128, %s951, %s922
        $region48: #{tpu_custom_call.1} parent=31 // pred_fallthru
          _
      $region32: #{tpu_custom_call.1} parent=5 // pred_fallthru
        _
      %p957 = scmp.le.s32.totalorder 2, %s21
      // Predicated region
      $region49: #{tpu_custom_call.1} parent=5 // pred_check
        %p958 = pneg %p957
      $region50: #{tpu_custom_call.1} parent=5 // pred_check_branch
        %960 = sbr.rel (%p958) target = $region52
      $region51: #{tpu_custom_call.1} parent=5 // pred_region
        %s961 = ssub.s32 %s21, 2
        // Predicated region
        $region53: #{tpu_custom_call.1} parent=51 // pred_check
          %p962 = pneg %p142
        $region54: #{tpu_custom_call.1} parent=51 // pred_check_branch
          %964 = sbr.rel (%p962) target = $region56
        $region55: #{tpu_custom_call.1} parent=51 // pred_region
          %s965 = sand.u32 %s127, 1
          %s966 = scalar_lea.sflag [#allocation4], %s965
          %s967 = sand.u32 %s127, 1
          %s968 = smul.addr %s967, 256
          %s969 = scalar_lea.vmem [#allocation7], %s968
          %970 = dma.done %s966, 4096
        $region56: #{tpu_custom_call.1} parent=51 // pred_fallthru
          _
        // Predicated region
        $region57: #{tpu_custom_call.1} parent=51 // pred_check
          %p971 = pneg %p170
        $region58: #{tpu_custom_call.1} parent=51 // pred_check_branch
          %973 = sbr.rel (%p971) target = $region60
        $region59: #{tpu_custom_call.1} parent=51 // pred_region
          %s974 = sand.u32 %s155, 1
          %s975 = scalar_lea.sflag [#allocation9], %s974
          %s976 = sand.u32 %s155, 1
          %s977 = smul.addr %s976, 8
          %s978 = scalar_lea.vmem [#allocation8], %s977
          %979 = dma.done %s975, 128
        $region60: #{tpu_custom_call.1} parent=51 // pred_fallthru
          _
      $region52: #{tpu_custom_call.1} parent=5 // pred_fallthru
        _
    $region6: #{tpu_custom_call.1} parent=1 // loop_footer
      %s25 = sadd.s32 1, %s21
    $region7: #{tpu_custom_call.1} parent=1 // loop_footer_branch
      %20 = sbr.rel target = $region3
    $region8: #{tpu_custom_call.1} parent=1 // loop_exit
      _
    %980 = vsyncpa [#allocation3], 1
    %s981 = scalar_lea.sflag [#allocation3], 1
    %982 = vsyncpa %s981, 1
    %983 = vsyncpa [#allocation6], 1
    %984 = vsyncpa [#allocation4], 1
    %s985 = scalar_lea.sflag [#allocation4], 1
    %986 = vsyncpa %s985, 1
    %987 = vsyncpa [#allocation9], 1
    %s988 = scalar_lea.sflag [#allocation9], 1
    %989 = vsyncpa %s988, 1

</llo_original>
